<compile_context>
chip_gen: v5e
topology: v5e:2x2
jax: 0.10.0
libtpu: 0.0.40
codegen_flags: <defaults>
</compile_context>

<pallas_src>
import functools
import math

import jax
import jax.numpy as jnp
from jax import lax
from jax.experimental import pallas as pl
from jax.experimental.pallas import tpu as pltpu

_MIB = 1024 * 1024


def _cdiv(a, b):
    return -(-a // b)


def _round_up(a, b):
    return _cdiv(a, b) * b


def _tpu_config():
    """Generation-dependent tuning knobs (conservative defaults if unknown)."""
    kind = ""
    try:
        kind = jax.devices()[0].device_kind.lower()
    except Exception:
        pass
    vmem = None
    try:
        vmem = int(pltpu.get_tpu_info().vmem_capacity_bytes)
    except Exception:
        vmem = None

    if "v7" in kind:
        return dict(cores=2, mxu=256, vmem=vmem or 64 * _MIB,
                    vmem_cap=56 * _MIB, weight_budget=8 * _MIB,
                    tile_m_streamed=512)
    if "v6" in kind:
        return dict(cores=1, mxu=256, vmem=vmem or 128 * _MIB,
                    vmem_cap=110 * _MIB, weight_budget=16 * _MIB,
                    tile_m_streamed=1024)
    if "v5" in kind and "p" not in kind.replace("tpu", ""):
        # v5e / v5 lite
        return dict(cores=1, mxu=128, vmem=vmem or 128 * _MIB,
                    vmem_cap=110 * _MIB, weight_budget=16 * _MIB,
                    tile_m_streamed=256)
    # v4 / v5p / unknown: conservative defaults.
    return dict(cores=1, mxu=128, vmem=vmem or 64 * _MIB,
                vmem_cap=48 * _MIB, weight_budget=12 * _MIB,
                tile_m_streamed=256)


def ffn_kernel(x_ref, w1_ref, b1_ref, w2_ref, b2_ref, o_ref, *scratch,
               approximate):
    # scratch is () (f32 output: accumulate in-place in the resident out block)
    # or (acc_ref,) (non-f32 output: separate f32 VMEM accumulator).
    acc_ref = scratch[0] if scratch else o_ref
    k = pl.program_id(1)

    @pl.when(k == 0)
    def _init():
        acc_ref[...] = jnp.zeros_like(acc_ref)

    # First matmul: native-dtype operands on the MXU, f32 accumulation.
    h = jnp.dot(x_ref[...], w1_ref[...], preferred_element_type=jnp.float32)
    h = h + b1_ref[...].astype(jnp.float32)

    if approximate:
        # tanh GELU -- the tanh runs on the EUP (a separate VLIW slot).
        c = math.sqrt(2.0 / math.pi)
        h = 0.5 * h * (1.0 + jnp.tanh(c * (h + 0.044715 * h * h * h)))
    else:
        # Exact GELU -- matches torch.nn.GELU(approximate='none').
        h = 0.5 * h * (1.0 + lax.erf(h * (1.0 / math.sqrt(2.0))))

    # Second matmul: cast hidden activations back to the weight dtype
    # (no-op for f32 weights) so the MXU runs at native throughput.
    acc_ref[...] += jnp.dot(h.astype(w2_ref.dtype), w2_ref[...],
                            preferred_element_type=jnp.float32)

    @pl.when(k == pl.num_programs(1) - 1)
    def _finalize():
        o_ref[...] = (acc_ref[...]
                      + b2_ref[...].astype(jnp.float32)).astype(o_ref.dtype)


def _vmem_estimate(tile_m, tile_h, dim, x_bytes, w_bytes, o_bytes,
                   buffered_weights, separate_acc):
    wfac = 1 if buffered_weights else 2
    return (2 * tile_m * dim * x_bytes                    # x tile (double-buffered)
            + 2 * tile_m * dim * o_bytes                  # out tile (double-buffered)
            + wfac * (dim * tile_h + tile_h * dim + tile_h + dim) * w_bytes
            + (tile_m * dim * 4 if separate_acc else 0)   # f32 accumulator scratch
            + 3 * tile_m * tile_h * 4)                    # live f32 GELU temporaries


def _choose_tile_h(hidden, dim, w_itemsize, cfg):
    if hidden % 128 != 0:
        return hidden  # block must equal the full extent if not lane-aligned
    # Keep tile_h a multiple of the MXU width (256 on v6e/v7x, 128 on v5e).
    gran = cfg["mxu"] if hidden % cfg["mxu"] == 0 else 128
    budget = cfg["weight_budget"]
    th = hidden
    while (th > gran and 2 * dim * th * w_itemsize > budget
           and (th // 2) % gran == 0):
        th //= 2
    return th


def _choose_tile_m(M, gran, dim, tile_h, n_h, cfg, x_bytes, w_bytes, o_bytes,
                   buffered_weights, separate_acc):
    # Weight-streamed path needs larger tile_m to stay off the HBM roofline.
    target = cfg["tile_m_streamed"] if n_h > 1 else 256
    if M >= 2 * target:
        tm = target
    else:
        # Small problems: aim for >= 2 grid blocks so both TCs (v7x) get work.
        tm = max(gran, _round_up(_cdiv(M, 2), gran)) if M > gran else gran
        tm = min(tm, _round_up(target, gran))
    # Shrink until the per-step working set fits the scoped-VMEM cap.
    while (tm > gran and
           _vmem_estimate(tm, tile_h, dim, x_bytes, w_bytes, o_bytes,
                          buffered_weights, separate_acc) * 3 // 2
           > cfg["vmem_cap"]):
        tm = max(gran, _round_up(tm // 2, gran))
    # v7x: prefer an even number of M blocks so both TensorCores stay busy.
    n_m = _cdiv(M, tm)
    if cfg["cores"] >= 2 and 1 < n_m <= 8 and n_m % 2 == 1:
        tm2 = max(gran, _round_up(_cdiv(M, n_m + 1), gran))
        if _cdiv(M, tm2) % 2 == 0:
            tm = tm2
    return tm


def _build_call(M_pad, dim, hidden, tile_m, tile_h, x_dtype, w_dtype,
                out_dtype, approximate, buffered_weights, cfg):
    n_m = M_pad // tile_m
    n_h = hidden // tile_h
    separate_acc = jnp.dtype(out_dtype) != jnp.dtype(jnp.float32)

    w_kwargs = {}
    if buffered_weights:
        # Grid-invariant weights/biases: a single VMEM copy is enough.
        w_kwargs = dict(pipeline_mode=pl.Buffered(1))

    in_specs = [
        pl.BlockSpec((tile_m, dim), lambda i, k: (i, 0)),              # x rows
        pl.BlockSpec((dim, tile_h), lambda i, k: (0, k), **w_kwargs),  # W1
        pl.BlockSpec((1, tile_h), lambda i, k: (0, k), **w_kwargs),    # b1
        pl.BlockSpec((tile_h, dim), lambda i, k: (k, 0), **w_kwargs),  # W2
        pl.BlockSpec((1, dim), lambda i, k: (0, 0), **w_kwargs),       # b2
    ]
    out_specs = pl.BlockSpec((tile_m, dim), lambda i, k: (i, 0))

    x_bytes = jnp.dtype(x_dtype).itemsize
    w_bytes = jnp.dtype(w_dtype).itemsize
    o_bytes = jnp.dtype(out_dtype).itemsize

    est = _vmem_estimate(tile_m, tile_h, dim, x_bytes, w_bytes, o_bytes,
                         buffered_weights, separate_acc)
    vmem_limit = int(min(max(est * 3 // 2, 32 * _MIB), cfg["vmem_cap"]))

    weight_bytes = (dim * hidden + hidden + hidden * dim + dim) * w_bytes
    if n_h > 1:
        weight_bytes *= n_m  # weights are re-streamed once per M block
    cost = pl.CostEstimate(
        flops=4 * M_pad * dim * hidden,          # two matmuls
        transcendentals=M_pad * hidden,          # one erf/tanh per activation
        bytes_accessed=(M_pad * dim * x_bytes + weight_bytes
                        + M_pad * dim * o_bytes),
    )

    scratch_shapes = []
    if separate_acc:
        scratch_shapes.append(pltpu.VMEM((tile_m, dim), jnp.float32))

    return pl.pallas_call(
        functools.partial(ffn_kernel, approximate=approximate),
        out_shape=jax.ShapeDtypeStruct((M_pad, dim), out_dtype),
        grid_spec=pltpu.PrefetchScalarGridSpec(
            num_scalar_prefetch=0,
            grid=(n_m, n_h),
            in_specs=in_specs,
            out_specs=out_specs,
            scratch_shapes=scratch_shapes,
        ),
        compiler_params=pltpu.CompilerParams(
            dimension_semantics=("parallel", "arbitrary"),
            vmem_limit_bytes=vmem_limit,
        ),
        cost_estimate=cost,
    )


def feed_forward(x, w1, b1, w2, b2, *, tile_m=None, tile_h=None,
                 approximate=False):
    """y = GELU(x @ W1 + b1) @ W2 + b2, for x of shape (..., dim)."""
    orig_shape = x.shape
    dim = int(x.shape[-1])
    hidden = int(w1.shape[1])
    M = 1
    for s in x.shape[:-1]:
        M *= int(s)

    cfg = _tpu_config()
    out_dtype = x.dtype

    x2 = x.reshape(M, dim)
    b1_2d = b1.reshape(1, hidden)
    b2_2d = b2.reshape(1, dim)

    x_bytes = jnp.dtype(x.dtype).itemsize
    w_bytes = jnp.dtype(w1.dtype).itemsize
    o_bytes = jnp.dtype(out_dtype).itemsize
    separate_acc = jnp.dtype(out_dtype) != jnp.dtype(jnp.float32)

    # NOTE: for best store bandwidth dim should be a multiple of 128 (true for
    # real model widths); sub-128 dims still lower (full-extent last dim).
    gran = 16 if x.dtype == jnp.bfloat16 else 8

    if tile_h is None:
        tile_h = _choose_tile_h(hidden, dim, w_bytes, cfg)
    else:
        tile_h = int(tile_h)
    assert hidden % tile_h == 0 and (tile_h % 128 == 0 or tile_h == hidden), \
        "tile_h must divide hidden and be lane-aligned (multiple of 128)"
    n_h = hidden // tile_h
    buffered_weights = (n_h == 1)  # grid-invariant weights -> single-buffer

    if tile_m is None:
        tile_m = _choose_tile_m(M, gran, dim, tile_h, n_h, cfg, x_bytes,
                                w_bytes, o_bytes, buffered_weights,
                                separate_acc)
    else:
        tile_m = max(gran, _round_up(int(tile_m), gran))

    M_pad = _round_up(M, tile_m)
    if M_pad != M:
        x2 = jnp.pad(x2, ((0, M_pad - M), (0, 0)))

    args = (M_pad, dim, hidden, tile_m, tile_h, x2.dtype, w1.dtype, out_dtype,
            approximate)
    try:
        out = _build_call(*args, buffered_weights=buffered_weights, cfg=cfg)(
            x2, w1, b1_2d, w2, b2_2d)
    except Exception as exc:  # noqa: BLE001
        msg = str(exc).lower()
        oom = any(s in msg for s in ("vmem", "resource", "exhaust", "memory"))
        if not buffered_weights or oom:
            raise  # never retry a VMEM/resource failure with a larger config
        # Fallback only if this build rejects pipeline_mode=pl.Buffered(1).
        out = _build_call(*args, buffered_weights=False, cfg=cfg)(
            x2, w1, b1_2d, w2, b2_2d)

    return out[:M].reshape(orig_shape)


def init_params(key, dim, mult=4, dtype=jnp.float32):
    """Deterministic init mimicking torch.nn.Linear (uniform +/- 1/sqrt(fan_in))."""
    hidden = dim * mult
    k1, k2, k3, k4 = jax.random.split(key, 4)
    bound1 = 1.0 / math.sqrt(dim)
    bound2 = 1.0 / math.sqrt(hidden)
    w1 = jax.random.uniform(k1, (dim, hidden), dtype, -bound1, bound1)
    b1 = jax.random.uniform(k2, (hidden,), dtype, -bound1, bound1)
    w2 = jax.random.uniform(k3, (hidden, dim), dtype, -bound2, bound2)
    b2 = jax.random.uniform(k4, (dim,), dtype, -bound2, bound2)
    return w1, b1, w2, b2


def _reference(x, w1, b1, w2, b2):
    dim = x.shape[-1]
    h = x.reshape(-1, dim) @ w1 + b1
    h = 0.5 * h * (1.0 + lax.erf(h / jnp.sqrt(2.0)))
    return (h @ w2 + b2).reshape(x.shape)


if __name__ == "__main__":
    key = jax.random.PRNGKey(0)
    kx, kp, kx2, kp2, kx3, kp3 = jax.random.split(key, 6)

    # Test 1: small module-consistent shapes (resident-weight path, n_h = 1).
    batch, seq, dim, mult = 2, 8, 32, 4
    x = jax.random.normal(kx, (batch, seq, dim), jnp.float32)
    w1, b1, w2, b2 = init_params(kp, dim, mult)
    y = jax.block_until_ready(feed_forward(x, w1, b1, w2, b2))
    y_ref = _reference(x, w1, b1, w2, b2)
    assert jnp.allclose(y, y_ref, atol=1e-5, rtol=1e-5), "mismatch (test 1)"

    # Test 2: ragged M + forced hidden-dim tiling with MXU-aligned tile_h=256
    # (f32 output -> accumulates directly into the resident output block).
    batch2, seq2, dim2, mult2 = 1, 13, 128, 4          # hidden = 512, n_h = 2
    x2 = jax.random.normal(kx2, (batch2, seq2, dim2), jnp.float32)
    p1, q1, p2, q2 = init_params(kp2, dim2, mult2)
    y2 = jax.block_until_ready(
        feed_forward(x2, p1, q1, p2, q2, tile_m=8, tile_h=256))
    y2_ref = _reference(x2, p1, q1, p2, q2)
    assert jnp.allclose(y2, y2_ref, atol=1e-4, rtol=1e-4), "mismatch (test 2)"

    # Test 3: bf16 weights/activations (separate f32 accumulator path).
    batch3, seq3, dim3, mult3 = 2, 8, 64, 4
    x3 = jax.random.normal(kx3, (batch3, seq3, dim3), jnp.float32)
    r1, s1, r2, s2 = init_params(kp3, dim3, mult3)
    x3b, r1b, s1b, r2b, s2b = (a.astype(jnp.bfloat16)
                               for a in (x3, r1, s1, r2, s2))
    y3 = jax.block_until_ready(feed_forward(x3b, r1b, s1b, r2b, s2b))
    y3_ref = _reference(*(a.astype(jnp.float32)
                          for a in (x3b, r1b, s1b, r2b, s2b)))
    assert jnp.allclose(y3.astype(jnp.float32), y3_ref, atol=1e-1, rtol=1e-1), \
        "mismatch (test 3, bf16)"

    print("KERNEL_OK")
</pallas_src>

<mosaic_0001>
module attributes {stable_mosaic.version = 11 : i64} {
  func.func @ffn_kernel(%arg0: i32, %arg1: i32, %arg2: memref<8x32xf32, #tpu.memory_space<vmem>>, %arg3: memref<32x128xf32, #tpu.memory_space<vmem>>, %arg4: memref<1x128xf32, #tpu.memory_space<vmem>>, %arg5: memref<128x32xf32, #tpu.memory_space<vmem>>, %arg6: memref<1x32xf32, #tpu.memory_space<vmem>>, %arg7: memref<8x32xf32, #tpu.memory_space<vmem>>) attributes {dimension_semantics = [#tpu.dimension_semantics<parallel>, #tpu.dimension_semantics<arbitrary>], iteration_bounds = array<i64: 2, 1>, scalar_prefetch = 0 : i64, scratch_operands = 0 : i64, tpu.core_type = #tpu.core_type<tc>, window_params = [{transform_indices = @transform_0, window_bounds = array<i64: 8, 32>}, {pipeline_mode = #tpu.pipeline_mode<synchronous>, transform_indices = @transform_1, window_bounds = array<i64: 32, 128>}, {pipeline_mode = #tpu.pipeline_mode<synchronous>, transform_indices = @transform_2, window_bounds = array<i64: 1, 128>}, {pipeline_mode = #tpu.pipeline_mode<synchronous>, transform_indices = @transform_3, window_bounds = array<i64: 128, 32>}, {pipeline_mode = #tpu.pipeline_mode<synchronous>, transform_indices = @transform_4, window_bounds = array<i64: 1, 32>}, {transform_indices = @transform_5, window_bounds = array<i64: 8, 32>}]} {
    %c0_i32 = arith.constant 0 : i32
    %0 = arith.cmpi eq, %arg1, %c0_i32 : i32
    %1 = arith.extui %0 : i1 to i32
    %c0_i32_0 = arith.constant 0 : i32
    %2 = arith.cmpi ne, %1, %c0_i32_0 : i32
    scf.if %2 {
      %cst_18 = arith.constant 0.000000e+00 : f32
      %25 = vector.broadcast %cst_18 : f32 to vector<8x32xf32>
      %c0_19 = arith.constant 0 : index
      %c0_20 = arith.constant 0 : index
      %26 = vector.load %arg7[%c0_19, %c0_20] : memref<8x32xf32, #tpu.memory_space<vmem>>, vector<8x32xf32>
      tpu.vector_store %arg7[%c0_19, %c0_20], %25 {strides = array<i32>} : memref<8x32xf32, #tpu.memory_space<vmem>>, vector<8x32xf32>,
    } else {
    }
    %c0 = arith.constant 0 : index
    %c0_1 = arith.constant 0 : index
    %3 = vector.load %arg2[%c0, %c0_1] : memref<8x32xf32, #tpu.memory_space<vmem>>, vector<8x32xf32>
    %c0_2 = arith.constant 0 : index
    %c0_3 = arith.constant 0 : index
    %4 = vector.load %arg3[%c0_2, %c0_3] : memref<32x128xf32, #tpu.memory_space<vmem>>, vector<32x128xf32>
    %cst = arith.constant dense<0.000000e+00> : vector<8x128xf32>
    %5 = tpu.matmul %3, %4, %cst {dimension_numbers = #tpu.dot_dimension_numbers<[1], [0], [0], [1], [0, 0, 1, 1], [], []>} : vector<8x32xf32>, vector<32x128xf32>, vector<8x128xf32> -> vector<8x128xf32>
    %c0_4 = arith.constant 0 : index
    %c0_5 = arith.constant 0 : index
    %6 = vector.load %arg4[%c0_4, %c0_5] : memref<1x128xf32, #tpu.memory_space<vmem>>, vector<1x128xf32>
    %7 = vector.broadcast %6 : vector<1x128xf32> to vector<8x128xf32>
    %8 = arith.addf %5, %7 : vector<8x128xf32>
    %cst_6 = arith.constant 5.000000e-01 : f32
    %9 = vector.broadcast %cst_6 : f32 to vector<8x128xf32>
    %10 = arith.mulf %9, %8 : vector<8x128xf32>
    %cst_7 = arith.constant 0.707106769 : f32
    %11 = vector.broadcast %cst_7 : f32 to vector<8x128xf32>
    %12 = arith.mulf %8, %11 : vector<8x128xf32>
    %13 = math.erf %12 : vector<8x128xf32>
    %cst_8 = arith.constant 1.000000e+00 : f32
    %14 = vector.broadcast %cst_8 : f32 to vector<8x128xf32>
    %15 = arith.addf %14, %13 : vector<8x128xf32>
    %16 = arith.mulf %10, %15 : vector<8x128xf32>
    %c0_9 = arith.constant 0 : index
    %c0_10 = arith.constant 0 : index
    %17 = vector.load %arg7[%c0_9, %c0_10] : memref<8x32xf32, #tpu.memory_space<vmem>>, vector<8x32xf32>
    %c0_11 = arith.constant 0 : index
    %c0_12 = arith.constant 0 : index
    %18 = vector.load %arg5[%c0_11, %c0_12] : memref<128x32xf32, #tpu.memory_space<vmem>>, vector<128x32xf32>
    %cst_13 = arith.constant dense<0.000000e+00> : vector<8x32xf32>
    %19 = tpu.matmul %16, %18, %cst_13 {dimension_numbers = #tpu.dot_dimension_numbers<[1], [0], [0], [1], [0, 0, 1, 1], [], []>} : vector<8x128xf32>, vector<128x32xf32>, vector<8x32xf32> -> vector<8x32xf32>
    %20 = arith.addf %17, %19 : vector<8x32xf32>
    %c0_14 = arith.constant 0 : index
    %c0_15 = arith.constant 0 : index
    %21 = vector.load %arg7[%c0_14, %c0_15] : memref<8x32xf32, #tpu.memory_space<vmem>>, vector<8x32xf32>
    tpu.vector_store %arg7[%c0_14, %c0_15], %20 {strides = array<i32>} : memref<8x32xf32, #tpu.memory_space<vmem>>, vector<8x32xf32>,
    %c0_i32_16 = arith.constant 0 : i32
    %22 = arith.cmpi eq, %arg1, %c0_i32_16 : i32
    %23 = arith.extui %22 : i1 to i32
    %c0_i32_17 = arith.constant 0 : i32
    %24 = arith.cmpi ne, %23, %c0_i32_17 : i32
    scf.if %24 {
      %c0_18 = arith.constant 0 : index
      %c0_19 = arith.constant 0 : index
      %25 = vector.load %arg7[%c0_18, %c0_19] : memref<8x32xf32, #tpu.memory_space<vmem>>, vector<8x32xf32>
      %c0_20 = arith.constant 0 : index
      %c0_21 = arith.constant 0 : index
      %26 = vector.load %arg6[%c0_20, %c0_21] : memref<1x32xf32, #tpu.memory_space<vmem>>, vector<1x32xf32>
      %27 = vector.broadcast %26 : vector<1x32xf32> to vector<8x32xf32>
      %28 = arith.addf %25, %27 : vector<8x32xf32>
      %c0_22 = arith.constant 0 : index
      %c0_23 = arith.constant 0 : index
      %29 = vector.load %arg7[%c0_22, %c0_23] : memref<8x32xf32, #tpu.memory_space<vmem>>, vector<8x32xf32>
      tpu.vector_store %arg7[%c0_22, %c0_23], %28 {strides = array<i32>} : memref<8x32xf32, #tpu.memory_space<vmem>>, vector<8x32xf32>,
    } else {
    }
    return
  }
  func.func @transform_0(%arg0: i32, %arg1: i32) -> (i32, i32) {
    %c0_i32 = arith.constant 0 : i32
    %c0_i32_0 = arith.constant 0 : i32
    return %arg0, %c0_i32 : i32, i32
  }
  func.func @transform_1(%arg0: i32, %arg1: i32) -> (i32, i32) {
    %c0_i32 = arith.constant 0 : i32
    %c0_i32_0 = arith.constant 0 : i32
    return %c0_i32, %arg1 : i32, i32
  }
  func.func @transform_2(%arg0: i32, %arg1: i32) -> (i32, i32) {
    %c0_i32 = arith.constant 0 : i32
    %c0_i32_0 = arith.constant 0 : i32
    return %c0_i32, %arg1 : i32, i32
  }
  func.func @transform_3(%arg0: i32, %arg1: i32) -> (i32, i32) {
    %c0_i32 = arith.constant 0 : i32
    %c0_i32_0 = arith.constant 0 : i32
    return %arg1, %c0_i32 : i32, i32
  }
  func.func @transform_4(%arg0: i32, %arg1: i32) -> (i32, i32) {
    %c0_i32 = arith.constant 0 : i32
    %c0_i32_0 = arith.constant 0 : i32
    %c0_i32_1 = arith.constant 0 : i32
    return %c0_i32, %c0_i32_0 : i32, i32
  }
  func.func @transform_5(%arg0: i32, %arg1: i32) -> (i32, i32) {
    %c0_i32 = arith.constant 0 : i32
    %c0_i32_0 = arith.constant 0 : i32
    return %arg0, %c0_i32 : i32, i32
  }
}

module attributes {stable_mosaic.version = 11 : i64} {
  func.func @ffn_kernel(%arg0: i32, %arg1: i32, %arg2: memref<8x32xf32, #tpu.memory_space<vmem>>, %arg3: memref<32x128xf32, #tpu.memory_space<vmem>>, %arg4: memref<1x128xf32, #tpu.memory_space<vmem>>, %arg5: memref<128x32xf32, #tpu.memory_space<vmem>>, %arg6: memref<1x32xf32, #tpu.memory_space<vmem>>, %arg7: memref<8x32xf32, #tpu.memory_space<vmem>>) attributes {dimension_semantics = [#tpu.dimension_semantics<parallel>, #tpu.dimension_semantics<arbitrary>], iteration_bounds = array<i64: 2, 1>, scalar_prefetch = 0 : i64, scratch_operands = 0 : i64, tpu.core_type = #tpu.core_type<tc>, window_params = [{transform_indices = @transform_0, window_bounds = array<i64: 8, 32>}, {transform_indices = @transform_1, window_bounds = array<i64: 32, 128>}, {transform_indices = @transform_2, window_bounds = array<i64: 1, 128>}, {transform_indices = @transform_3, window_bounds = array<i64: 128, 32>}, {pipeline_mode = #tpu.pipeline_mode<synchronous>, transform_indices = @transform_4, window_bounds = array<i64: 1, 32>}, {transform_indices = @transform_5, window_bounds = array<i64: 8, 32>}]} {
    %c0_i32 = arith.constant 0 : i32
    %0 = arith.cmpi eq, %arg1, %c0_i32 : i32
    %1 = arith.extui %0 : i1 to i32
    %c0_i32_0 = arith.constant 0 : i32
    %2 = arith.cmpi ne, %1, %c0_i32_0 : i32
    scf.if %2 {
      %cst_18 = arith.constant 0.000000e+00 : f32
      %25 = vector.broadcast %cst_18 : f32 to vector<8x32xf32>
      %c0_19 = arith.constant 0 : index
      %c0_20 = arith.constant 0 : index
      %26 = vector.load %arg7[%c0_19, %c0_20] : memref<8x32xf32, #tpu.memory_space<vmem>>, vector<8x32xf32>
      tpu.vector_store %arg7[%c0_19, %c0_20], %25 {strides = array<i32>} : memref<8x32xf32, #tpu.memory_space<vmem>>, vector<8x32xf32>,
    } else {
    }
    %c0 = arith.constant 0 : index
    %c0_1 = arith.constant 0 : index
    %3 = vector.load %arg2[%c0, %c0_1] : memref<8x32xf32, #tpu.memory_space<vmem>>, vector<8x32xf32>
    %c0_2 = arith.constant 0 : index
    %c0_3 = arith.constant 0 : index
    %4 = vector.load %arg3[%c0_2, %c0_3] : memref<32x128xf32, #tpu.memory_space<vmem>>, vector<32x128xf32>
    %cst = arith.constant dense<0.000000e+00> : vector<8x128xf32>
    %5 = tpu.matmul %3, %4, %cst {dimension_numbers = #tpu.dot_dimension_numbers<[1], [0], [0], [1], [0, 0, 1, 1], [], []>} : vector<8x32xf32>, vector<32x128xf32>, vector<8x128xf32> -> vector<8x128xf32>
    %c0_4 = arith.constant 0 : index
    %c0_5 = arith.constant 0 : index
    %6 = vector.load %arg4[%c0_4, %c0_5] : memref<1x128xf32, #tpu.memory_space<vmem>>, vector<1x128xf32>
    %7 = vector.broadcast %6 : vector<1x128xf32> to vector<8x128xf32>
    %8 = arith.addf %5, %7 : vector<8x128xf32>
    %cst_6 = arith.constant 5.000000e-01 : f32
    %9 = vector.broadcast %cst_6 : f32 to vector<8x128xf32>
    %10 = arith.mulf %9, %8 : vector<8x128xf32>
    %cst_7 = arith.constant 0.707106769 : f32
    %11 = vector.broadcast %cst_7 : f32 to vector<8x128xf32>
    %12 = arith.mulf %8, %11 : vector<8x128xf32>
    %13 = math.erf %12 : vector<8x128xf32>
    %cst_8 = arith.constant 1.000000e+00 : f32
    %14 = vector.broadcast %cst_8 : f32 to vector<8x128xf32>
    %15 = arith.addf %14, %13 : vector<8x128xf32>
    %16 = arith.mulf %10, %15 : vector<8x128xf32>
    %c0_9 = arith.constant 0 : index
    %c0_10 = arith.constant 0 : index
    %17 = vector.load %arg7[%c0_9, %c0_10] : memref<8x32xf32, #tpu.memory_space<vmem>>, vector<8x32xf32>
    %c0_11 = arith.constant 0 : index
    %c0_12 = arith.constant 0 : index
    %18 = vector.load %arg5[%c0_11, %c0_12] : memref<128x32xf32, #tpu.memory_space<vmem>>, vector<128x32xf32>
    %cst_13 = arith.constant dense<0.000000e+00> : vector<8x32xf32>
    %19 = tpu.matmul %16, %18, %cst_13 {dimension_numbers = #tpu.dot_dimension_numbers<[1], [0], [0], [1], [0, 0, 1, 1], [], []>} : vector<8x128xf32>, vector<128x32xf32>, vector<8x32xf32> -> vector<8x32xf32>
    %20 = arith.addf %17, %19 : vector<8x32xf32>
    %c0_14 = arith.constant 0 : index
    %c0_15 = arith.constant 0 : index
    %21 = vector.load %arg7[%c0_14, %c0_15] : memref<8x32xf32, #tpu.memory_space<vmem>>, vector<8x32xf32>
    tpu.vector_store %arg7[%c0_14, %c0_15], %20 {strides = array<i32>} : memref<8x32xf32, #tpu.memory_space<vmem>>, vector<8x32xf32>,
    %c0_i32_16 = arith.constant 0 : i32
    %22 = arith.cmpi eq, %arg1, %c0_i32_16 : i32
    %23 = arith.extui %22 : i1 to i32
    %c0_i32_17 = arith.constant 0 : i32
    %24 = arith.cmpi ne, %23, %c0_i32_17 : i32
    scf.if %24 {
      %c0_18 = arith.constant 0 : index
      %c0_19 = arith.constant 0 : index
      %25 = vector.load %arg7[%c0_18, %c0_19] : memref<8x32xf32, #tpu.memory_space<vmem>>, vector<8x32xf32>
      %c0_20 = arith.constant 0 : index
      %c0_21 = arith.constant 0 : index
      %26 = vector.load %arg6[%c0_20, %c0_21] : memref<1x32xf32, #tpu.memory_space<vmem>>, vector<1x32xf32>
      %27 = vector.broadcast %26 : vector<1x32xf32> to vector<8x32xf32>
      %28 = arith.addf %25, %27 : vector<8x32xf32>
      %c0_22 = arith.constant 0 : index
      %c0_23 = arith.constant 0 : index
      %29 = vector.load %arg7[%c0_22, %c0_23] : memref<8x32xf32, #tpu.memory_space<vmem>>, vector<8x32xf32>
      tpu.vector_store %arg7[%c0_22, %c0_23], %28 {strides = array<i32>} : memref<8x32xf32, #tpu.memory_space<vmem>>, vector<8x32xf32>,
    } else {
    }
    return
  }
  func.func @transform_0(%arg0: i32, %arg1: i32) -> (i32, i32) {
    %c0_i32 = arith.constant 0 : i32
    %c0_i32_0 = arith.constant 0 : i32
    return %arg0, %c0_i32 : i32, i32
  }
  func.func @transform_1(%arg0: i32, %arg1: i32) -> (i32, i32) {
    %c0_i32 = arith.constant 0 : i32
    %c0_i32_0 = arith.constant 0 : i32
    return %c0_i32, %arg1 : i32, i32
  }
  func.func @transform_2(%arg0: i32, %arg1: i32) -> (i32, i32) {
    %c0_i32 = arith.constant 0 : i32
    %c0_i32_0 = arith.constant 0 : i32
    return %c0_i32, %arg1 : i32, i32
  }
  func.func @transform_3(%arg0: i32, %arg1: i32) -> (i32, i32) {
    %c0_i32 = arith.constant 0 : i32
    %c0_i32_0 = arith.constant 0 : i32
    return %arg1, %c0_i32 : i32, i32
  }
  func.func @transform_4(%arg0: i32, %arg1: i32) -> (i32, i32) {
    %c0_i32 = arith.constant 0 : i32
    %c0_i32_0 = arith.constant 0 : i32
    %c0_i32_1 = arith.constant 0 : i32
    return %c0_i32, %c0_i32_0 : i32, i32
  }
  func.func @transform_5(%arg0: i32, %arg1: i32) -> (i32, i32) {
    %c0_i32 = arith.constant 0 : i32
    %c0_i32_0 = arith.constant 0 : i32
    return %arg0, %c0_i32 : i32, i32
  }
}

</mosaic_0001>

<llo_original>
// kernel: tpu_custom_call.1
$region0: #{tpu_custom_call.1}
  #allocation0 [shape = 'u32[]', space=smem, size = 0x4, offset = 0x4, fixed_abs, tag = 'smem constant byte address 0x4 - core index']
  #allocation1 [shape = 'u32[72,128]{1,0:T(1,128)}', space=vmem, size = 0x9000, scoped, tag = 'internal scratch']
  %s0 = inlined_call_operand.vmem [shape: f32[16,32], index: 0, kind: input, shape index: {}]
  %s1 = inlined_call_operand.vmem [shape: f32[32,128], index: 1, kind: input, shape index: {}]
  %s2 = inlined_call_operand.vmem [shape: f32[1,128], index: 2, kind: input, shape index: {}]
  %s3 = inlined_call_operand.vmem [shape: f32[128,32], index: 3, kind: input, shape index: {}]
  %s4 = inlined_call_operand.vmem [shape: f32[1,32], index: 4, kind: input, shape index: {}]
  %s5 = inlined_call_operand.hbm [shape: f32[16,32], index: 5, kind: output, shape index: {}]
  %s6 = sld [smem:[#allocation0]]
  $region61: #{tpu_custom_call.1} parent=0
    _
  %s8 = ssub.s32 1, %s6
  %s9 = scalar_select 0, %s8, %s6
  $region1: #{tpu_custom_call.1} parent=0
    #allocation2 [shape = 'u8[8192]{0}', space=vmem, size = 0x2000, scoped, tag = 'output window, operand 0']
    #allocation3 [shape = 's32[2]{0}', space=sflag, size = 0x8, scoped, tag = 'scoped memory for tpu_custom_call.1']
    %10 = vsyncpa [#allocation3], 0
    %s11 = scalar_lea.sflag [#allocation3], 1
    %12 = vsyncpa %s11, 0
    loop: start=0, step=1, limit=4
    $region2: #{tpu_custom_call.1} parent=1 // loop_pre_header
      _
    $region3: #{tpu_custom_call.1} parent=1 // loop_header
      %s14 = sphi 0, %s18
      %p15 = scmp.ge.s32.totalorder %s14, 4
      %s21 = sphi 0, %s33
      %s22 = sphi 0, %s29
      %s23 = sphi 0, %s21
      %s24 = sphi 0, %s22
      %s25 = sphi 0, %s23
      %s26 = sphi 0, %s24
      %s36 = sphi 0, %s38
      %s39 = sphi 0, %s36
      %s40 = sphi 0, %s39
      %s56 = sphi 0, %s40
      %s62 = sphi 0, %s64
      %s65 = sphi 0, %s62
      %s66 = sphi 0, %s65
      %s82 = sphi 0, %s66
      %s88 = sphi 0, %s90
      %s91 = sphi 0, %s88
      %s92 = sphi 0, %s91
      %s108 = sphi 0, %s92
      %s114 = sphi 0, %s116
      %s117 = sphi 0, %s114
      %s118 = sphi 0, %s117
      %s134 = sphi 0, %s118
      %s138 = sphi 0, %s138
      %s140 = sphi 0, %s138
      %s141 = sphi 0, %s140
      %s155 = sphi 0, %s141
      %s161 = sphi 0, %s163
      %s164 = sphi 0, %s161
      %s165 = sphi 0, %s164
      %s181 = sphi 0, %s165
    $region4: #{tpu_custom_call.1} parent=1 // loop_header_branch
      %17 = sbr.rel (%p15) target = $region8
    $region5: #{tpu_custom_call.1} parent=1 // loop_body
      %s19 = ssub.s32 %s14, 1
      %s20 = ssub.s32 %s14, 2
      %s27 = sadd.s32 1, %s22
      %p28 = scmp.ge.s32.totalorder %s27, 1
      %s29 = scalar_select %p28, 0, %s27
      %s30 = sadd.s32 1, %s21
      %s31 = scalar_select %p28, %s30, %s21
      %p32 = scmp.ge.s32.totalorder %s31, 2
      %s33 = scalar_select %p32, 0, %s31
      %s34 = ssub.s32 %s21, %s33
      %p35 = scmp.eq.s32.totalorder %s34, 0
      %s37 = sadd.s32 %s36, 1
      %s38 = scalar_select %p35, %s36, %s37
      %p41 = pneg %p35
      %p42 = scmp.eq.s32.totalorder %s14, 1
      %p43 = por %p41, %p42
      %p44 = scmp.ne.s32.totalorder %s36, %s39
      %p45 = scmp.eq.s32.totalorder %s14, 0
      %p46 = por %p44, %p45
      %p47 = scmp.ne.s32.totalorder %s36, %s39
      %p48 = scmp.eq.s32.totalorder %s19, 1
      %p49 = por %p47, %p48
      %p50 = scmp.ne.s32.totalorder %s39, %s40
      %p51 = scmp.eq.s32.totalorder %s19, 0
      %p52 = por %p50, %p51
      %p53 = scmp.ne.s32.totalorder %s39, %s40
      %p54 = scmp.eq.s32.totalorder %s20, 1
      %p55 = por %p53, %p54
      %p57 = scmp.ne.s32.totalorder %s40, %s56
      %p58 = scmp.eq.s32.totalorder %s20, 0
      %p59 = por %p57, %p58
      %s60 = ssub.s32 %s22, %s29
      %p61 = scmp.eq.s32.totalorder %s60, 0
      %s63 = sadd.s32 %s62, 1
      %s64 = scalar_select %p61, %s62, %s63
      %p67 = pneg %p61
      %p68 = scmp.eq.s32.totalorder %s14, 1
      %p69 = por %p67, %p68
      %p70 = scmp.ne.s32.totalorder %s62, %s65
      %p71 = scmp.eq.s32.totalorder %s14, 0
      %p72 = por %p70, %p71
      %p73 = scmp.ne.s32.totalorder %s62, %s65
      %p74 = scmp.eq.s32.totalorder %s19, 1
      %p75 = por %p73, %p74
      %p76 = scmp.ne.s32.totalorder %s65, %s66
      %p77 = scmp.eq.s32.totalorder %s19, 0
      %p78 = por %p76, %p77
      %p79 = scmp.ne.s32.totalorder %s65, %s66
      %p80 = scmp.eq.s32.totalorder %s20, 1
      %p81 = por %p79, %p80
      %p83 = scmp.ne.s32.totalorder %s66, %s82
      %p84 = scmp.eq.s32.totalorder %s20, 0
      %p85 = por %p83, %p84
      %s86 = ssub.s32 %s22, %s29
      %p87 = scmp.eq.s32.totalorder %s86, 0
      %s89 = sadd.s32 %s88, 1
      %s90 = scalar_select %p87, %s88, %s89
      %p93 = pneg %p87
      %p94 = scmp.eq.s32.totalorder %s14, 1
      %p95 = por %p93, %p94
      %p96 = scmp.ne.s32.totalorder %s88, %s91
      %p97 = scmp.eq.s32.totalorder %s14, 0
      %p98 = por %p96, %p97
      %p99 = scmp.ne.s32.totalorder %s88, %s91
      %p100 = scmp.eq.s32.totalorder %s19, 1
      %p101 = por %p99, %p100
      %p102 = scmp.ne.s32.totalorder %s91, %s92
      %p103 = scmp.eq.s32.totalorder %s19, 0
      %p104 = por %p102, %p103
      %p105 = scmp.ne.s32.totalorder %s91, %s92
      %p106 = scmp.eq.s32.totalorder %s20, 1
      %p107 = por %p105, %p106
      %p109 = scmp.ne.s32.totalorder %s92, %s108
      %p110 = scmp.eq.s32.totalorder %s20, 0
      %p111 = por %p109, %p110
      %s112 = ssub.s32 %s22, %s29
      %p113 = scmp.eq.s32.totalorder %s112, 0
      %s115 = sadd.s32 %s114, 1
      %s116 = scalar_select %p113, %s114, %s115
      %p119 = pneg %p113
      %p120 = scmp.eq.s32.totalorder %s14, 1
      %p121 = por %p119, %p120
      %p122 = scmp.ne.s32.totalorder %s114, %s117
      %p123 = scmp.eq.s32.totalorder %s14, 0
      %p124 = por %p122, %p123
      %p125 = scmp.ne.s32.totalorder %s114, %s117
      %p126 = scmp.eq.s32.totalorder %s19, 1
      %p127 = por %p125, %p126
      %p128 = scmp.ne.s32.totalorder %s117, %s118
      %p129 = scmp.eq.s32.totalorder %s19, 0
      %p130 = por %p128, %p129
      %p131 = scmp.ne.s32.totalorder %s117, %s118
      %p132 = scmp.eq.s32.totalorder %s20, 1
      %p133 = por %p131, %p132
      %p135 = scmp.ne.s32.totalorder %s118, %s134
      %p136 = scmp.eq.s32.totalorder %s20, 0
      %p137 = por %p135, %p136
      %s139 = sadd.s32 %s138, 1
      %p142 = scmp.eq.s32.totalorder %s14, 1
      %p143 = scmp.ne.s32.totalorder %s138, %s140
      %p144 = scmp.eq.s32.totalorder %s14, 0
      %p145 = por %p143, %p144
      %p146 = scmp.ne.s32.totalorder %s138, %s140
      %p147 = scmp.eq.s32.totalorder %s19, 1
      %p148 = por %p146, %p147
      %p149 = scmp.ne.s32.totalorder %s140, %s141
      %p150 = scmp.eq.s32.totalorder %s19, 0
      %p151 = por %p149, %p150
      %p152 = scmp.ne.s32.totalorder %s140, %s141
      %p153 = scmp.eq.s32.totalorder %s20, 1
      %p154 = por %p152, %p153
      %p156 = scmp.ne.s32.totalorder %s141, %s155
      %p157 = scmp.eq.s32.totalorder %s20, 0
      %p158 = por %p156, %p157
      %s159 = ssub.s32 %s21, %s33
      %p160 = scmp.eq.s32.totalorder %s159, 0
      %s162 = sadd.s32 %s161, 1
      %s163 = scalar_select %p160, %s161, %s162
      %p166 = pneg %p160
      %p167 = scmp.eq.s32.totalorder %s14, 1
      %p168 = por %p166, %p167
      %p169 = scmp.ne.s32.totalorder %s161, %s164
      %p170 = scmp.eq.s32.totalorder %s14, 0
      %p171 = por %p169, %p170
      %p172 = scmp.ne.s32.totalorder %s161, %s164
      %p173 = scmp.eq.s32.totalorder %s19, 1
      %p174 = por %p172, %p173
      %p175 = scmp.ne.s32.totalorder %s164, %s165
      %p176 = scmp.eq.s32.totalorder %s19, 0
      %p177 = por %p175, %p176
      %p178 = scmp.ne.s32.totalorder %s164, %s165
      %p179 = scmp.eq.s32.totalorder %s20, 1
      %p180 = por %p178, %p179
      %p182 = scmp.ne.s32.totalorder %s165, %s181
      %p183 = scmp.eq.s32.totalorder %s20, 0
      %p184 = por %p182, %p183
      %p185 = scmp.le.s32.totalorder 1, %s14
      %p186 = scmp.lt.s32.totalorder %s14, 3
      %p187 = pnand %p185, %p186
      %p188 = pneg %p187
      // Predicated region
      $region9: #{tpu_custom_call.1} parent=5 // pred_check
        _
      $region10: #{tpu_custom_call.1} parent=5 // pred_check_branch
        %190 = sbr.rel (%p187) target = $region12
      $region11: #{tpu_custom_call.1} parent=5 // pred_region
        %s191 = ssub.s32 %s14, 1
        // Predicated region
        $region13: #{tpu_custom_call.1} parent=11 // pred_check
          %p192 = pneg %p78
        $region14: #{tpu_custom_call.1} parent=11 // pred_check_branch
          %194 = sbr.rel (%p192) target = $region16
        $region15: #{tpu_custom_call.1} parent=11 // pred_region
          %p195 = scmp.lt.s32.totalorder %s24, 0
          %s196 = scalar_select %p195, %s24, 0
          %s197 = smul.addr %s196, 8
          %s198 = scalar_lea.vmem %s1, %s197
        $region16: #{tpu_custom_call.1} parent=11 // pred_fallthru
          _
        // Predicated region
        $region17: #{tpu_custom_call.1} parent=11 // pred_check
          %p199 = pneg %p104
        $region18: #{tpu_custom_call.1} parent=11 // pred_check_branch
          %201 = sbr.rel (%p199) target = $region20
        $region19: #{tpu_custom_call.1} parent=11 // pred_region
          %p202 = scmp.lt.s32.totalorder %s24, 0
          %s203 = scalar_select %p202, %s24, 0
          %s204 = scalar_lea.vmem %s2, %s203
        $region20: #{tpu_custom_call.1} parent=11 // pred_fallthru
          _
        // Predicated region
        $region21: #{tpu_custom_call.1} parent=11 // pred_check
          %p205 = pneg %p130
        $region22: #{tpu_custom_call.1} parent=11 // pred_check_branch
          %207 = sbr.rel (%p205) target = $region24
        $region23: #{tpu_custom_call.1} parent=11 // pred_region
          %s208 = smul.u32 16, %s24
          %p209 = scmp.lt.s32.totalorder %s208, 15
          %s210 = scalar_select %p209, %s208, 15
          %s211 = smul.addr %s210, 8
          %s212 = scalar_lea.vmem %s3, %s211
          %s213 = smul.u32 16, %s24
        $region24: #{tpu_custom_call.1} parent=11 // pred_fallthru
          _
        // Predicated region
        $region25: #{tpu_custom_call.1} parent=11 // pred_check
          %p214 = pneg %p151
        $region26: #{tpu_custom_call.1} parent=11 // pred_check_branch
          %216 = sbr.rel (%p214) target = $region28
        $region27: #{tpu_custom_call.1} parent=11 // pred_region
          _
        $region28: #{tpu_custom_call.1} parent=11 // pred_fallthru
          _
      $region12: #{tpu_custom_call.1} parent=5 // pred_fallthru
        _
      %p217 = scmp.lt.s32.totalorder %s14, 2
      // Predicated region
      $region29: #{tpu_custom_call.1} parent=5 // pred_check
        %p218 = pneg %p217
      $region30: #{tpu_custom_call.1} parent=5 // pred_check_branch
        %220 = sbr.rel (%p218) target = $region32
      $region31: #{tpu_custom_call.1} parent=5 // pred_region
        // Predicated region
        $region33: #{tpu_custom_call.1} parent=31 // pred_check
          %p221 = pneg %p46
        $region34: #{tpu_custom_call.1} parent=31 // pred_check_branch
          %223 = sbr.rel (%p221) target = $region36
        $region35: #{tpu_custom_call.1} parent=31 // pred_region
          %p224 = scmp.lt.s32.totalorder %s21, 1
          %s225 = scalar_select %p224, %s21, 1
          %s226 = smul.addr %s225, 8
          %s227 = scalar_lea.vmem %s0, %s226
        $region36: #{tpu_custom_call.1} parent=31 // pred_fallthru
          _
      $region32: #{tpu_custom_call.1} parent=5 // pred_fallthru
        _
      %p228 = scmp.le.s32.totalorder 1, %s14
      %p229 = scmp.lt.s32.totalorder %s14, 3
      %p230 = pnand %p228, %p229
      %p231 = pneg %p230
      // Predicated region
      $region37: #{tpu_custom_call.1} parent=5 // pred_check
        _
      $region38: #{tpu_custom_call.1} parent=5 // pred_check_branch
        %233 = sbr.rel (%p230) target = $region40
      $region39: #{tpu_custom_call.1} parent=5 // pred_region
        %s234 = ssub.s32 %s14, 1
        %p235 = scmp.lt.s32.totalorder %s23, 1
        %s236 = scalar_select %p235, %s23, 1
        %s237 = smul.addr %s236, 8
        %s238 = scalar_lea.vmem %s0, %s237
        %p239 = pneg %p52
        %p240 = pneg %p49
        %p241 = scmp.lt.s32.totalorder %s24, 0
        %s242 = scalar_select %p241, %s24, 0
        %s243 = smul.addr %s242, 8
        %s244 = scalar_lea.vmem %s1, %s243
        %p245 = pneg %p78
        %p246 = pneg %p75
        %p247 = scmp.lt.s32.totalorder %s24, 0
        %s248 = scalar_select %p247, %s24, 0
        %s249 = scalar_lea.vmem %s2, %s248
        %p250 = pneg %p104
        %p251 = pneg %p101
        %s252 = smul.u32 16, %s24
        %p253 = scmp.lt.s32.totalorder %s252, 15
        %s254 = scalar_select %p253, %s252, 15
        %s255 = smul.addr %s254, 8
        %s256 = scalar_lea.vmem %s3, %s255
        %p257 = pneg %p130
        %p258 = pneg %p127
        %p259 = pneg %p151
        %p260 = pneg %p148
        %p261 = pneg %p177
        %p262 = pneg %p174
        %s263 = sand.u32 %s164, 1
        %s264 = scalar_lea.sflag [#allocation3], %s263
        %s265 = sand.u32 %s164, 1
        %s266 = smul.addr %s265, 8
        %s267 = scalar_lea.vmem [#allocation2], %s266
        %p268 = scmp.lt.s32.totalorder %s23, 1
        %s269 = scalar_select %p268, %s23, 1
        %s270 = smul.addr %s269, 8
        %s271 = scalar_lea.vmem %s0, %s270
        %p272 = scmp.lt.s32.totalorder %s24, 0
        %s273 = scalar_select %p272, %s24, 0
        %s274 = smul.addr %s273, 8
        %s275 = scalar_lea.vmem %s1, %s274
        %p276 = scmp.lt.s32.totalorder %s24, 0
        %s277 = scalar_select %p276, %s24, 0
        %s278 = scalar_lea.vmem %s2, %s277
        %s279 = smul.u32 16, %s24
        %p280 = scmp.lt.s32.totalorder %s279, 15
        %s281 = scalar_select %p280, %s279, 15
        %s282 = smul.addr %s281, 8
        %s283 = scalar_lea.vmem %s3, %s282
        %s284 = smul.u32 16, %s24
        %p285 = scmp.eq.s32.totalorder %s24, 0
        // Predicated region
        $region41: #{tpu_custom_call.1} parent=39 // pred_check
          %p286 = pneg %p285
        $region42: #{tpu_custom_call.1} parent=39 // pred_check_branch
          %288 = sbr.rel (%p286) target = $region44
        $region43: #{tpu_custom_call.1} parent=39 // pred_region
          %vm289 = vcmask 261120
          %290 = vst.msk [vmem:[%s267] sm:$0xff] %vm289, 0.0
        $region44: #{tpu_custom_call.1} parent=39 // pred_fallthru
          _
        %v291 = vld [vmem:[%s271] sm:$0xff]
        %v292 = vld [vmem:[%s275] sm:$0xff]
        %v293 = vld [vmem:[%s275 + $0x8] sm:$0xff]
        %v294 = vld [vmem:[%s275 + $0x10] sm:$0xff]
        %v295 = vld [vmem:[%s275 + $0x18] sm:$0xff]
        %v296 = vld [vmem:[%s278] sm:$0x1]
        %v298 = vperm.slane %v296, 0
        %vm300 = vcmask 261120
        %v302 = vsel %vm300, %v291, 0
        %304 = vmatpush.msra.mxu0 0.0
        %305 = vmatpush.msra.mxu0 0.0
        %306 = vmatpush.msra.mxu0 0.0
        %307 = vmatpush.msra.mxu0 0.0
        %308 = vmatpush.msra.mxu0 0.0
        %309 = vmatpush.msra.mxu0 0.0
        %310 = vmatpush.msra.mxu0 0.0
        %311 = vmatpush.msra.mxu0 0.0
        %312 = vmatpush.msra.mxu0 0.0
        %313 = vmatpush.msra.mxu0 0.0
        %314 = vmatpush.msra.mxu0 0.0
        %315 = vmatpush.msra.mxu0 0.0
        %316 = vmatpush.msra.mxu0 %v295
        %317 = vmatpush.msra.mxu0 %v294
        %318 = vmatpush.msra.mxu0 %v293
        %319 = vmatpush.msra.mxu0 %v292
        %320 = vmatmul.f32.gmra.mxu0 %v302
        %v321 = vpop.f32.mrf.mxu0
        %v322 = vadd.f32 %v298, %v321
        %323 = vdwg.mxu0
        %v324 = vmul.f32 %v322, 0.5
        %v325 = vmul.f32 %v322, 0.70710677
        %v326 = vmul.f32 %v325, %v325
        %v327 = vmin.f32 16.0, %v326
        %v328 = vmul.f32 %v327, 2.1237322e-06
        %v329 = vadd.f32 %v328, 0.00028619796
        %v330 = vmul.f32 %v327, %v329
        %v331 = vadd.f32 %v330, 0.0036580483
        %v332 = vmul.f32 %v327, %v331
        %v333 = vadd.f32 %v332, 0.05243302
        %v334 = vmul.f32 %v327, %v333
        %v335 = vadd.f32 %v334, 0.18741608
        %v336 = vmul.f32 %v327, %v335
        %v337 = vadd.f32 %v336, 1.1283791
        %v338 = vmul.f32 %v325, %v337
        %v339 = vmul.f32 %v327, 3.8918573e-05
        %v340 = vadd.f32 %v339, 0.001143296
        %v341 = vmul.f32 %v327, %v340
        %v342 = vadd.f32 %v341, 0.014752088
        %v343 = vmul.f32 %v327, %v342
        %v344 = vadd.f32 %v343, 0.112945676
        %v345 = vmul.f32 %v327, %v344
        %v346 = vadd.f32 %v345, 0.4994258
        %v347 = vmul.f32 %v327, %v346
        %v348 = vadd.f32 %v347, 1.0
        %v349 = vrcp.pop %v348
        %v350 = vmul.f32 %v348, %v349
        %v351 = vsub.f32 1.0, %v350
        %v352 = vmul.f32 %v349, %v351
        %v353 = vadd.f32 %v349, %v352
        %vm354 = vweird.f32 %v348
        %vm355 = vweird.f32 %v349
        %vm356 = vmor %vm354, %vm355
        %v357 = vsel %vm356, %v349, %v353
        %v358 = vand.u32 2147483647, %v348
        %vm359 = vcmp.eq.f32.partialorder %v358, 8.507059e+37
        %v360 = vand.u32 %v348, 2147483648
        %v361 = vor.u32 1.1754944e-38, %v360
        %v362 = vsel %vm359, %v361, %v357
        %v363 = vmul.f32 %v338, %v362
        %v364 = vmin.f32 %v363, 1.0
        %v365 = vmax.f32 %v364, -1.0
        %v366 = vadd.f32 %v365, 1.0
        %v367 = vmul.f32 %v324, %v366
        %v368 = vld [vmem:[%s267] sm:$0xff]
        %v369 = vld [vmem:[%s283] sm:$0xff]
        %v370 = vld [vmem:[%s283 + $0x8] sm:$0xff]
        %v371 = vld [vmem:[%s283 + $0x10] sm:$0xff]
        %v372 = vld [vmem:[%s283 + $0x18] sm:$0xff]
        %v373 = vld [vmem:[%s283 + $0x20] sm:$0xff]
        %v374 = vld [vmem:[%s283 + $0x28] sm:$0xff]
        %v375 = vld [vmem:[%s283 + $0x30] sm:$0xff]
        %v376 = vld [vmem:[%s283 + $0x38] sm:$0xff]
        %v377 = vld [vmem:[%s283 + $0x40] sm:$0xff]
        %v378 = vld [vmem:[%s283 + $0x48] sm:$0xff]
        %v379 = vld [vmem:[%s283 + $0x50] sm:$0xff]
        %v380 = vld [vmem:[%s283 + $0x58] sm:$0xff]
        %v381 = vld [vmem:[%s283 + $0x60] sm:$0xff]
        %v382 = vld [vmem:[%s283 + $0x68] sm:$0xff]
        %v383 = vld [vmem:[%s283 + $0x70] sm:$0xff]
        %v384 = vld [vmem:[%s283 + $0x78] sm:$0xff]
        %385 = vmatpush.msra.mxu0 %v384
        %386 = vmatpush.msra.mxu0 %v383
        %387 = vmatpush.msra.mxu0 %v382
        %388 = vmatpush.msra.mxu0 %v381
        %389 = vmatpush.msra.mxu0 %v380
        %390 = vmatpush.msra.mxu0 %v379
        %391 = vmatpush.msra.mxu0 %v378
        %392 = vmatpush.msra.mxu0 %v377
        %393 = vmatpush.msra.mxu0 %v376
        %394 = vmatpush.msra.mxu0 %v375
        %395 = vmatpush.msra.mxu0 %v374
        %396 = vmatpush.msra.mxu0 %v373
        %397 = vmatpush.msra.mxu0 %v372
        %398 = vmatpush.msra.mxu0 %v371
        %399 = vmatpush.msra.mxu0 %v370
        %400 = vmatpush.msra.mxu0 %v369
        %401 = vmatmul.f32.gmra.mxu0 %v367
        %v402 = vpop.f32.mrf.mxu0
        %v403 = vadd.f32 0.0, %v402
        %404 = vdwg.mxu0
        %v405 = vadd.f32 %v368, %v403
        %406 = vst.msk [vmem:[%s267] sm:$0xff] %vm300, %v405
        // Predicated region
        $region45: #{tpu_custom_call.1} parent=39 // pred_check
          %p407 = pneg %p285
        $region46: #{tpu_custom_call.1} parent=39 // pred_check_branch
          %409 = sbr.rel (%p407) target = $region48
        $region47: #{tpu_custom_call.1} parent=39 // pred_region
          %v410 = vld [vmem:[%s267] sm:$0xff]
          %v411 = vld [vmem:[%s4] sm:$0x1]
          %v413 = vperm.slane %v411, 0
          %v415 = vadd.f32 %v410, %v413
          %416 = vst.msk [vmem:[%s267] sm:$0xff] %vm300, %v415
        $region48: #{tpu_custom_call.1} parent=39 // pred_fallthru
          _
        %s417 = sand.u32 %s164, 1
        %s418 = scalar_lea.sflag [#allocation3], %s417
        %s419 = sand.u32 %s164, 1
        %s420 = smul.addr %s419, 8
        %s421 = scalar_lea.vmem [#allocation2], %s420
        // Predicated region
        $region49: #{tpu_custom_call.1} parent=39 // pred_check
          %p422 = pneg %p174
        $region50: #{tpu_custom_call.1} parent=39 // pred_check_branch
          %424 = sbr.rel (%p422) target = $region52
        $region51: #{tpu_custom_call.1} parent=39 // pred_region
          %426 = vsyncadd %s418, 0
          %s427 = smul.addr %s23, 8
          %s428 = scalar_lea.hbm %s5, %s427
          %s430 = sshll.u32 %s421, 4
          %s431 = int_to_ptr.vmem [resolvable:$true] %s430
          %s432 = sshll.u32 %s428, 4
          %s433 = int_to_ptr.hbm [resolvable:$true] %s432
          %435 = dma.vmem_to_hbm [thread:$0]  %s431, 128, %s433, %s418
        $region52: #{tpu_custom_call.1} parent=39 // pred_fallthru
          _
      $region40: #{tpu_custom_call.1} parent=5 // pred_fallthru
        _
      %p436 = scmp.le.s32.totalorder 2, %s14
      // Predicated region
      $region53: #{tpu_custom_call.1} parent=5 // pred_check
        %p437 = pneg %p436
      $region54: #{tpu_custom_call.1} parent=5 // pred_check_branch
        %439 = sbr.rel (%p437) target = $region56
      $region55: #{tpu_custom_call.1} parent=5 // pred_region
        %s440 = ssub.s32 %s14, 2
        // Predicated region
        $region57: #{tpu_custom_call.1} parent=55 // pred_check
          %p441 = pneg %p180
        $region58: #{tpu_custom_call.1} parent=55 // pred_check_branch
          %443 = sbr.rel (%p441) target = $region60
        $region59: #{tpu_custom_call.1} parent=55 // pred_region
          %s444 = sand.u32 %s165, 1
          %s445 = scalar_lea.sflag [#allocation3], %s444
          %s446 = sand.u32 %s165, 1
          %s447 = smul.addr %s446, 8
          %s448 = scalar_lea.vmem [#allocation2], %s447
          %450 = dma.done %s445, 128
        $region60: #{tpu_custom_call.1} parent=55 // pred_fallthru
          _
      $region56: #{tpu_custom_call.1} parent=5 // pred_fallthru
        _
    $region6: #{tpu_custom_call.1} parent=1 // loop_footer
      %s18 = sadd.s32 1, %s14
    $region7: #{tpu_custom_call.1} parent=1 // loop_footer_branch
      %13 = sbr.rel target = $region3
    $region8: #{tpu_custom_call.1} parent=1 // loop_exit
      _
    %451 = vsyncpa [#allocation3], 1
    %s452 = scalar_lea.sflag [#allocation3], 1
    %453 = vsyncpa %s452, 1

// kernel: tpu_custom_call.1
$region0: #{tpu_custom_call.1}
  #allocation0 [shape = 'u32[]', space=smem, size = 0x4, offset = 0x4, fixed_abs, tag = 'smem constant byte address 0x4 - core index']
  #allocation1 [shape = 'u32[72,128]{1,0:T(1,128)}', space=vmem, size = 0x9000, scoped, tag = 'internal scratch']
  %s0 = inlined_call_operand.vmem [shape: f32[16,32], index: 0, kind: input, shape index: {}]
  %s1 = inlined_call_operand.vmem [shape: f32[32,128], index: 1, kind: input, shape index: {}]
  %s2 = inlined_call_operand.vmem [shape: f32[1,128], index: 2, kind: input, shape index: {}]
  %s3 = inlined_call_operand.vmem [shape: f32[128,32], index: 3, kind: input, shape index: {}]
  %s4 = inlined_call_operand.vmem [shape: f32[1,32], index: 4, kind: input, shape index: {}]
  %s5 = inlined_call_operand.hbm [shape: f32[16,32], index: 5, kind: output, shape index: {}]
  %s6 = sld [smem:[#allocation0]]
  $region61: #{tpu_custom_call.1} parent=0
    _
  %s8 = ssub.s32 1, %s6
  %s9 = scalar_select 0, %s8, %s6
  $region1: #{tpu_custom_call.1} parent=0
    #allocation2 [shape = 'u8[8192]{0}', space=vmem, size = 0x2000, scoped, tag = 'output window, operand 0']
    #allocation3 [shape = 's32[2]{0}', space=sflag, size = 0x8, scoped, tag = 'scoped memory for tpu_custom_call.1']
    %10 = vsyncpa [#allocation3], 0
    %s11 = scalar_lea.sflag [#allocation3], 1
    %12 = vsyncpa %s11, 0
    loop: start=0, step=1, limit=4
    $region2: #{tpu_custom_call.1} parent=1 // loop_pre_header
      _
    $region3: #{tpu_custom_call.1} parent=1 // loop_header
      %s14 = sphi 0, %s18
      %p15 = scmp.ge.s32.totalorder %s14, 4
      %s21 = sphi 0, %s33
      %s22 = sphi 0, %s29
      %s23 = sphi 0, %s21
      %s24 = sphi 0, %s22
      %s25 = sphi 0, %s23
      %s26 = sphi 0, %s24
      %s36 = sphi 0, %s38
      %s39 = sphi 0, %s36
      %s40 = sphi 0, %s39
      %s56 = sphi 0, %s40
      %s62 = sphi 0, %s64
      %s65 = sphi 0, %s62
      %s66 = sphi 0, %s65
      %s82 = sphi 0, %s66
      %s88 = sphi 0, %s90
      %s91 = sphi 0, %s88
      %s92 = sphi 0, %s91
      %s108 = sphi 0, %s92
      %s114 = sphi 0, %s116
      %s117 = sphi 0, %s114
      %s118 = sphi 0, %s117
      %s134 = sphi 0, %s118
      %s138 = sphi 0, %s138
      %s140 = sphi 0, %s138
      %s141 = sphi 0, %s140
      %s155 = sphi 0, %s141
      %s161 = sphi 0, %s163
      %s164 = sphi 0, %s161
      %s165 = sphi 0, %s164
      %s181 = sphi 0, %s165
    $region4: #{tpu_custom_call.1} parent=1 // loop_header_branch
      %17 = sbr.rel (%p15) target = $region8
    $region5: #{tpu_custom_call.1} parent=1 // loop_body
      %s19 = ssub.s32 %s14, 1
      %s20 = ssub.s32 %s14, 2
      %s27 = sadd.s32 1, %s22
      %p28 = scmp.ge.s32.totalorder %s27, 1
      %s29 = scalar_select %p28, 0, %s27
      %s30 = sadd.s32 1, %s21
      %s31 = scalar_select %p28, %s30, %s21
      %p32 = scmp.ge.s32.totalorder %s31, 2
      %s33 = scalar_select %p32, 0, %s31
      %s34 = ssub.s32 %s21, %s33
      %p35 = scmp.eq.s32.totalorder %s34, 0
      %s37 = sadd.s32 %s36, 1
      %s38 = scalar_select %p35, %s36, %s37
      %p41 = pneg %p35
      %p42 = scmp.eq.s32.totalorder %s14, 1
      %p43 = por %p41, %p42
      %p44 = scmp.ne.s32.totalorder %s36, %s39
      %p45 = scmp.eq.s32.totalorder %s14, 0
      %p46 = por %p44, %p45
      %p47 = scmp.ne.s32.totalorder %s36, %s39
      %p48 = scmp.eq.s32.totalorder %s19, 1
      %p49 = por %p47, %p48
      %p50 = scmp.ne.s32.totalorder %s39, %s40
      %p51 = scmp.eq.s32.totalorder %s19, 0
      %p52 = por %p50, %p51
      %p53 = scmp.ne.s32.totalorder %s39, %s40
      %p54 = scmp.eq.s32.totalorder %s20, 1
      %p55 = por %p53, %p54
      %p57 = scmp.ne.s32.totalorder %s40, %s56
      %p58 = scmp.eq.s32.totalorder %s20, 0
      %p59 = por %p57, %p58
      %s60 = ssub.s32 %s22, %s29
      %p61 = scmp.eq.s32.totalorder %s60, 0
      %s63 = sadd.s32 %s62, 1
      %s64 = scalar_select %p61, %s62, %s63
      %p67 = pneg %p61
      %p68 = scmp.eq.s32.totalorder %s14, 1
      %p69 = por %p67, %p68
      %p70 = scmp.ne.s32.totalorder %s62, %s65
      %p71 = scmp.eq.s32.totalorder %s14, 0
      %p72 = por %p70, %p71
      %p73 = scmp.ne.s32.totalorder %s62, %s65
      %p74 = scmp.eq.s32.totalorder %s19, 1
      %p75 = por %p73, %p74
      %p76 = scmp.ne.s32.totalorder %s65, %s66
      %p77 = scmp.eq.s32.totalorder %s19, 0
      %p78 = por %p76, %p77
      %p79 = scmp.ne.s32.totalorder %s65, %s66
      %p80 = scmp.eq.s32.totalorder %s20, 1
      %p81 = por %p79, %p80
      %p83 = scmp.ne.s32.totalorder %s66, %s82
      %p84 = scmp.eq.s32.totalorder %s20, 0
      %p85 = por %p83, %p84
      %s86 = ssub.s32 %s22, %s29
      %p87 = scmp.eq.s32.totalorder %s86, 0
      %s89 = sadd.s32 %s88, 1
      %s90 = scalar_select %p87, %s88, %s89
      %p93 = pneg %p87
      %p94 = scmp.eq.s32.totalorder %s14, 1
      %p95 = por %p93, %p94
      %p96 = scmp.ne.s32.totalorder %s88, %s91
      %p97 = scmp.eq.s32.totalorder %s14, 0
      %p98 = por %p96, %p97
      %p99 = scmp.ne.s32.totalorder %s88, %s91
      %p100 = scmp.eq.s32.totalorder %s19, 1
      %p101 = por %p99, %p100
      %p102 = scmp.ne.s32.totalorder %s91, %s92
      %p103 = scmp.eq.s32.totalorder %s19, 0
      %p104 = por %p102, %p103
      %p105 = scmp.ne.s32.totalorder %s91, %s92
      %p106 = scmp.eq.s32.totalorder %s20, 1
      %p107 = por %p105, %p106
      %p109 = scmp.ne.s32.totalorder %s92, %s108
      %p110 = scmp.eq.s32.totalorder %s20, 0
      %p111 = por %p109, %p110
      %s112 = ssub.s32 %s22, %s29
      %p113 = scmp.eq.s32.totalorder %s112, 0
      %s115 = sadd.s32 %s114, 1
      %s116 = scalar_select %p113, %s114, %s115
      %p119 = pneg %p113
      %p120 = scmp.eq.s32.totalorder %s14, 1
      %p121 = por %p119, %p120
      %p122 = scmp.ne.s32.totalorder %s114, %s117
      %p123 = scmp.eq.s32.totalorder %s14, 0
      %p124 = por %p122, %p123
      %p125 = scmp.ne.s32.totalorder %s114, %s117
      %p126 = scmp.eq.s32.totalorder %s19, 1
      %p127 = por %p125, %p126
      %p128 = scmp.ne.s32.totalorder %s117, %s118
      %p129 = scmp.eq.s32.totalorder %s19, 0
      %p130 = por %p128, %p129
      %p131 = scmp.ne.s32.totalorder %s117, %s118
      %p132 = scmp.eq.s32.totalorder %s20, 1
      %p133 = por %p131, %p132
      %p135 = scmp.ne.s32.totalorder %s118, %s134
      %p136 = scmp.eq.s32.totalorder %s20, 0
      %p137 = por %p135, %p136
      %s139 = sadd.s32 %s138, 1
      %p142 = scmp.eq.s32.totalorder %s14, 1
      %p143 = scmp.ne.s32.totalorder %s138, %s140
      %p144 = scmp.eq.s32.totalorder %s14, 0
      %p145 = por %p143, %p144
      %p146 = scmp.ne.s32.totalorder %s138, %s140
      %p147 = scmp.eq.s32.totalorder %s19, 1
      %p148 = por %p146, %p147
      %p149 = scmp.ne.s32.totalorder %s140, %s141
      %p150 = scmp.eq.s32.totalorder %s19, 0
      %p151 = por %p149, %p150
      %p152 = scmp.ne.s32.totalorder %s140, %s141
      %p153 = scmp.eq.s32.totalorder %s20, 1
      %p154 = por %p152, %p153
      %p156 = scmp.ne.s32.totalorder %s141, %s155
      %p157 = scmp.eq.s32.totalorder %s20, 0
      %p158 = por %p156, %p157
      %s159 = ssub.s32 %s21, %s33
      %p160 = scmp.eq.s32.totalorder %s159, 0
      %s162 = sadd.s32 %s161, 1
      %s163 = scalar_select %p160, %s161, %s162
      %p166 = pneg %p160
      %p167 = scmp.eq.s32.totalorder %s14, 1
      %p168 = por %p166, %p167
      %p169 = scmp.ne.s32.totalorder %s161, %s164
      %p170 = scmp.eq.s32.totalorder %s14, 0
      %p171 = por %p169, %p170
      %p172 = scmp.ne.s32.totalorder %s161, %s164
      %p173 = scmp.eq.s32.totalorder %s19, 1
      %p174 = por %p172, %p173
      %p175 = scmp.ne.s32.totalorder %s164, %s165
      %p176 = scmp.eq.s32.totalorder %s19, 0
      %p177 = por %p175, %p176
      %p178 = scmp.ne.s32.totalorder %s164, %s165
      %p179 = scmp.eq.s32.totalorder %s20, 1
      %p180 = por %p178, %p179
      %p182 = scmp.ne.s32.totalorder %s165, %s181
      %p183 = scmp.eq.s32.totalorder %s20, 0
      %p184 = por %p182, %p183
      %p185 = scmp.le.s32.totalorder 1, %s14
      %p186 = scmp.lt.s32.totalorder %s14, 3
      %p187 = pnand %p185, %p186
      %p188 = pneg %p187
      // Predicated region
      $region9: #{tpu_custom_call.1} parent=5 // pred_check
        _
      $region10: #{tpu_custom_call.1} parent=5 // pred_check_branch
        %190 = sbr.rel (%p187) target = $region12
      $region11: #{tpu_custom_call.1} parent=5 // pred_region
        %s191 = ssub.s32 %s14, 1
        // Predicated region
        $region13: #{tpu_custom_call.1} parent=11 // pred_check
          %p192 = pneg %p78
        $region14: #{tpu_custom_call.1} parent=11 // pred_check_branch
          %194 = sbr.rel (%p192) target = $region16
        $region15: #{tpu_custom_call.1} parent=11 // pred_region
          %p195 = scmp.lt.s32.totalorder %s24, 0
          %s196 = scalar_select %p195, %s24, 0
          %s197 = smul.addr %s196, 8
          %s198 = scalar_lea.vmem %s1, %s197
        $region16: #{tpu_custom_call.1} parent=11 // pred_fallthru
          _
        // Predicated region
        $region17: #{tpu_custom_call.1} parent=11 // pred_check
          %p199 = pneg %p104
        $region18: #{tpu_custom_call.1} parent=11 // pred_check_branch
          %201 = sbr.rel (%p199) target = $region20
        $region19: #{tpu_custom_call.1} parent=11 // pred_region
          %p202 = scmp.lt.s32.totalorder %s24, 0
          %s203 = scalar_select %p202, %s24, 0
          %s204 = scalar_lea.vmem %s2, %s203
        $region20: #{tpu_custom_call.1} parent=11 // pred_fallthru
          _
        // Predicated region
        $region21: #{tpu_custom_call.1} parent=11 // pred_check
          %p205 = pneg %p130
        $region22: #{tpu_custom_call.1} parent=11 // pred_check_branch
          %207 = sbr.rel (%p205) target = $region24
        $region23: #{tpu_custom_call.1} parent=11 // pred_region
          %s208 = smul.u32 16, %s24
          %p209 = scmp.lt.s32.totalorder %s208, 15
          %s210 = scalar_select %p209, %s208, 15
          %s211 = smul.addr %s210, 8
          %s212 = scalar_lea.vmem %s3, %s211
          %s213 = smul.u32 16, %s24
        $region24: #{tpu_custom_call.1} parent=11 // pred_fallthru
          _
        // Predicated region
        $region25: #{tpu_custom_call.1} parent=11 // pred_check
          %p214 = pneg %p151
        $region26: #{tpu_custom_call.1} parent=11 // pred_check_branch
          %216 = sbr.rel (%p214) target = $region28
        $region27: #{tpu_custom_call.1} parent=11 // pred_region
          _
        $region28: #{tpu_custom_call.1} parent=11 // pred_fallthru
          _
      $region12: #{tpu_custom_call.1} parent=5 // pred_fallthru
        _
      %p217 = scmp.lt.s32.totalorder %s14, 2
      // Predicated region
      $region29: #{tpu_custom_call.1} parent=5 // pred_check
        %p218 = pneg %p217
      $region30: #{tpu_custom_call.1} parent=5 // pred_check_branch
        %220 = sbr.rel (%p218) target = $region32
      $region31: #{tpu_custom_call.1} parent=5 // pred_region
        // Predicated region
        $region33: #{tpu_custom_call.1} parent=31 // pred_check
          %p221 = pneg %p46
        $region34: #{tpu_custom_call.1} parent=31 // pred_check_branch
          %223 = sbr.rel (%p221) target = $region36
        $region35: #{tpu_custom_call.1} parent=31 // pred_region
          %p224 = scmp.lt.s32.totalorder %s21, 1
          %s225 = scalar_select %p224, %s21, 1
          %s226 = smul.addr %s225, 8
          %s227 = scalar_lea.vmem %s0, %s226
        $region36: #{tpu_custom_call.1} parent=31 // pred_fallthru
          _
      $region32: #{tpu_custom_call.1} parent=5 // pred_fallthru
        _
      %p228 = scmp.le.s32.totalorder 1, %s14
      %p229 = scmp.lt.s32.totalorder %s14, 3
      %p230 = pnand %p228, %p229
      %p231 = pneg %p230
      // Predicated region
      $region37: #{tpu_custom_call.1} parent=5 // pred_check
        _
      $region38: #{tpu_custom_call.1} parent=5 // pred_check_branch
        %233 = sbr.rel (%p230) target = $region40
      $region39: #{tpu_custom_call.1} parent=5 // pred_region
        %s234 = ssub.s32 %s14, 1
        %p235 = scmp.lt.s32.totalorder %s23, 1
        %s236 = scalar_select %p235, %s23, 1
        %s237 = smul.addr %s236, 8
        %s238 = scalar_lea.vmem %s0, %s237
        %p239 = pneg %p52
        %p240 = pneg %p49
        %p241 = scmp.lt.s32.totalorder %s24, 0
        %s242 = scalar_select %p241, %s24, 0
        %s243 = smul.addr %s242, 8
        %s244 = scalar_lea.vmem %s1, %s243
        %p245 = pneg %p78
        %p246 = pneg %p75
        %p247 = scmp.lt.s32.totalorder %s24, 0
        %s248 = scalar_select %p247, %s24, 0
        %s249 = scalar_lea.vmem %s2, %s248
        %p250 = pneg %p104
        %p251 = pneg %p101
        %s252 = smul.u32 16, %s24
        %p253 = scmp.lt.s32.totalorder %s252, 15
        %s254 = scalar_select %p253, %s252, 15
        %s255 = smul.addr %s254, 8
        %s256 = scalar_lea.vmem %s3, %s255
        %p257 = pneg %p130
        %p258 = pneg %p127
        %p259 = pneg %p151
        %p260 = pneg %p148
        %p261 = pneg %p177
        %p262 = pneg %p174
        %s263 = sand.u32 %s164, 1
        %s264 = scalar_lea.sflag [#allocation3], %s263
        %s265 = sand.u32 %s164, 1
        %s266 = smul.addr %s265, 8
        %s267 = scalar_lea.vmem [#allocation2], %s266
        %p268 = scmp.lt.s32.totalorder %s23, 1
        %s269 = scalar_select %p268, %s23, 1
        %s270 = smul.addr %s269, 8
        %s271 = scalar_lea.vmem %s0, %s270
        %p272 = scmp.lt.s32.totalorder %s24, 0
        %s273 = scalar_select %p272, %s24, 0
        %s274 = smul.addr %s273, 8
        %s275 = scalar_lea.vmem %s1, %s274
        %p276 = scmp.lt.s32.totalorder %s24, 0
        %s277 = scalar_select %p276, %s24, 0
        %s278 = scalar_lea.vmem %s2, %s277
        %s279 = smul.u32 16, %s24
        %p280 = scmp.lt.s32.totalorder %s279, 15
        %s281 = scalar_select %p280, %s279, 15
        %s282 = smul.addr %s281, 8
        %s283 = scalar_lea.vmem %s3, %s282
        %s284 = smul.u32 16, %s24
        %p285 = scmp.eq.s32.totalorder %s24, 0
        // Predicated region
        $region41: #{tpu_custom_call.1} parent=39 // pred_check
          %p286 = pneg %p285
        $region42: #{tpu_custom_call.1} parent=39 // pred_check_branch
          %288 = sbr.rel (%p286) target = $region44
        $region43: #{tpu_custom_call.1} parent=39 // pred_region
          %vm289 = vcmask 261120
          %290 = vst.msk [vmem:[%s267] sm:$0xff] %vm289, 0.0
        $region44: #{tpu_custom_call.1} parent=39 // pred_fallthru
          _
        %v291 = vld [vmem:[%s271] sm:$0xff]
        %v292 = vld [vmem:[%s275] sm:$0xff]
        %v293 = vld [vmem:[%s275 + $0x8] sm:$0xff]
        %v294 = vld [vmem:[%s275 + $0x10] sm:$0xff]
        %v295 = vld [vmem:[%s275 + $0x18] sm:$0xff]
        %v296 = vld [vmem:[%s278] sm:$0x1]
        %v298 = vperm.slane %v296, 0
        %vm300 = vcmask 261120
        %v302 = vsel %vm300, %v291, 0
        %304 = vmatpush.msra.mxu0 0.0
        %305 = vmatpush.msra.mxu0 0.0
        %306 = vmatpush.msra.mxu0 0.0
        %307 = vmatpush.msra.mxu0 0.0
        %308 = vmatpush.msra.mxu0 0.0
        %309 = vmatpush.msra.mxu0 0.0
        %310 = vmatpush.msra.mxu0 0.0
        %311 = vmatpush.msra.mxu0 0.0
        %312 = vmatpush.msra.mxu0 0.0
        %313 = vmatpush.msra.mxu0 0.0
        %314 = vmatpush.msra.mxu0 0.0
        %315 = vmatpush.msra.mxu0 0.0
        %316 = vmatpush.msra.mxu0 %v295
        %317 = vmatpush.msra.mxu0 %v294
        %318 = vmatpush.msra.mxu0 %v293
        %319 = vmatpush.msra.mxu0 %v292
        %320 = vmatmul.f32.gmra.mxu0 %v302
        %v321 = vpop.f32.mrf.mxu0
        %v322 = vadd.f32 %v298, %v321
        %323 = vdwg.mxu0
        %v324 = vmul.f32 %v322, 0.5
        %v325 = vmul.f32 %v322, 0.70710677
        %v326 = vmul.f32 %v325, %v325
        %v327 = vmin.f32 16.0, %v326
        %v328 = vmul.f32 %v327, 2.1237322e-06
        %v329 = vadd.f32 %v328, 0.00028619796
        %v330 = vmul.f32 %v327, %v329
        %v331 = vadd.f32 %v330, 0.0036580483
        %v332 = vmul.f32 %v327, %v331
        %v333 = vadd.f32 %v332, 0.05243302
        %v334 = vmul.f32 %v327, %v333
        %v335 = vadd.f32 %v334, 0.18741608
        %v336 = vmul.f32 %v327, %v335
        %v337 = vadd.f32 %v336, 1.1283791
        %v338 = vmul.f32 %v325, %v337
        %v339 = vmul.f32 %v327, 3.8918573e-05
        %v340 = vadd.f32 %v339, 0.001143296
        %v341 = vmul.f32 %v327, %v340
        %v342 = vadd.f32 %v341, 0.014752088
        %v343 = vmul.f32 %v327, %v342
        %v344 = vadd.f32 %v343, 0.112945676
        %v345 = vmul.f32 %v327, %v344
        %v346 = vadd.f32 %v345, 0.4994258
        %v347 = vmul.f32 %v327, %v346
        %v348 = vadd.f32 %v347, 1.0
        %v349 = vrcp.pop %v348
        %v350 = vmul.f32 %v348, %v349
        %v351 = vsub.f32 1.0, %v350
        %v352 = vmul.f32 %v349, %v351
        %v353 = vadd.f32 %v349, %v352
        %vm354 = vweird.f32 %v348
        %vm355 = vweird.f32 %v349
        %vm356 = vmor %vm354, %vm355
        %v357 = vsel %vm356, %v349, %v353
        %v358 = vand.u32 2147483647, %v348
        %vm359 = vcmp.eq.f32.partialorder %v358, 8.507059e+37
        %v360 = vand.u32 %v348, 2147483648
        %v361 = vor.u32 1.1754944e-38, %v360
        %v362 = vsel %vm359, %v361, %v357
        %v363 = vmul.f32 %v338, %v362
        %v364 = vmin.f32 %v363, 1.0
        %v365 = vmax.f32 %v364, -1.0
        %v366 = vadd.f32 %v365, 1.0
        %v367 = vmul.f32 %v324, %v366
        %v368 = vld [vmem:[%s267] sm:$0xff]
        %v369 = vld [vmem:[%s283] sm:$0xff]
        %v370 = vld [vmem:[%s283 + $0x8] sm:$0xff]
        %v371 = vld [vmem:[%s283 + $0x10] sm:$0xff]
        %v372 = vld [vmem:[%s283 + $0x18] sm:$0xff]
        %v373 = vld [vmem:[%s283 + $0x20] sm:$0xff]
        %v374 = vld [vmem:[%s283 + $0x28] sm:$0xff]
        %v375 = vld [vmem:[%s283 + $0x30] sm:$0xff]
        %v376 = vld [vmem:[%s283 + $0x38] sm:$0xff]
        %v377 = vld [vmem:[%s283 + $0x40] sm:$0xff]
        %v378 = vld [vmem:[%s283 + $0x48] sm:$0xff]
        %v379 = vld [vmem:[%s283 + $0x50] sm:$0xff]
        %v380 = vld [vmem:[%s283 + $0x58] sm:$0xff]
        %v381 = vld [vmem:[%s283 + $0x60] sm:$0xff]
        %v382 = vld [vmem:[%s283 + $0x68] sm:$0xff]
        %v383 = vld [vmem:[%s283 + $0x70] sm:$0xff]
        %v384 = vld [vmem:[%s283 + $0x78] sm:$0xff]
        %385 = vmatpush.msra.mxu0 %v384
        %386 = vmatpush.msra.mxu0 %v383
        %387 = vmatpush.msra.mxu0 %v382
        %388 = vmatpush.msra.mxu0 %v381
        %389 = vmatpush.msra.mxu0 %v380
        %390 = vmatpush.msra.mxu0 %v379
        %391 = vmatpush.msra.mxu0 %v378
        %392 = vmatpush.msra.mxu0 %v377
        %393 = vmatpush.msra.mxu0 %v376
        %394 = vmatpush.msra.mxu0 %v375
        %395 = vmatpush.msra.mxu0 %v374
        %396 = vmatpush.msra.mxu0 %v373
        %397 = vmatpush.msra.mxu0 %v372
        %398 = vmatpush.msra.mxu0 %v371
        %399 = vmatpush.msra.mxu0 %v370
        %400 = vmatpush.msra.mxu0 %v369
        %401 = vmatmul.f32.gmra.mxu0 %v367
        %v402 = vpop.f32.mrf.mxu0
        %v403 = vadd.f32 0.0, %v402
        %404 = vdwg.mxu0
        %v405 = vadd.f32 %v368, %v403
        %406 = vst.msk [vmem:[%s267] sm:$0xff] %vm300, %v405
        // Predicated region
        $region45: #{tpu_custom_call.1} parent=39 // pred_check
          %p407 = pneg %p285
        $region46: #{tpu_custom_call.1} parent=39 // pred_check_branch
          %409 = sbr.rel (%p407) target = $region48
        $region47: #{tpu_custom_call.1} parent=39 // pred_region
          %v410 = vld [vmem:[%s267] sm:$0xff]
          %v411 = vld [vmem:[%s4] sm:$0x1]
          %v413 = vperm.slane %v411, 0
          %v415 = vadd.f32 %v410, %v413
          %416 = vst.msk [vmem:[%s267] sm:$0xff] %vm300, %v415
        $region48: #{tpu_custom_call.1} parent=39 // pred_fallthru
          _
        %s417 = sand.u32 %s164, 1
        %s418 = scalar_lea.sflag [#allocation3], %s417
        %s419 = sand.u32 %s164, 1
        %s420 = smul.addr %s419, 8
        %s421 = scalar_lea.vmem [#allocation2], %s420
        // Predicated region
        $region49: #{tpu_custom_call.1} parent=39 // pred_check
          %p422 = pneg %p174
        $region50: #{tpu_custom_call.1} parent=39 // pred_check_branch
          %424 = sbr.rel (%p422) target = $region52
        $region51: #{tpu_custom_call.1} parent=39 // pred_region
          %426 = vsyncadd %s418, 0
          %s427 = smul.addr %s23, 8
          %s428 = scalar_lea.hbm %s5, %s427
          %s430 = sshll.u32 %s421, 4
          %s431 = int_to_ptr.vmem [resolvable:$true] %s430
          %s432 = sshll.u32 %s428, 4
          %s433 = int_to_ptr.hbm [resolvable:$true] %s432
          %435 = dma.vmem_to_hbm [thread:$0]  %s431, 128, %s433, %s418
        $region52: #{tpu_custom_call.1} parent=39 // pred_fallthru
          _
      $region40: #{tpu_custom_call.1} parent=5 // pred_fallthru
        _
      %p436 = scmp.le.s32.totalorder 2, %s14
      // Predicated region
      $region53: #{tpu_custom_call.1} parent=5 // pred_check
        %p437 = pneg %p436
      $region54: #{tpu_custom_call.1} parent=5 // pred_check_branch
        %439 = sbr.rel (%p437) target = $region56
      $region55: #{tpu_custom_call.1} parent=5 // pred_region
        %s440 = ssub.s32 %s14, 2
        // Predicated region
        $region57: #{tpu_custom_call.1} parent=55 // pred_check
          %p441 = pneg %p180
        $region58: #{tpu_custom_call.1} parent=55 // pred_check_branch
          %443 = sbr.rel (%p441) target = $region60
        $region59: #{tpu_custom_call.1} parent=55 // pred_region
          %s444 = sand.u32 %s165, 1
          %s445 = scalar_lea.sflag [#allocation3], %s444
          %s446 = sand.u32 %s165, 1
          %s447 = smul.addr %s446, 8
          %s448 = scalar_lea.vmem [#allocation2], %s447
          %450 = dma.done %s445, 128
        $region60: #{tpu_custom_call.1} parent=55 // pred_fallthru
          _
      $region56: #{tpu_custom_call.1} parent=5 // pred_fallthru
        _
    $region6: #{tpu_custom_call.1} parent=1 // loop_footer
      %s18 = sadd.s32 1, %s14
    $region7: #{tpu_custom_call.1} parent=1 // loop_footer_branch
      %13 = sbr.rel target = $region3
    $region8: #{tpu_custom_call.1} parent=1 // loop_exit
      _
    %451 = vsyncpa [#allocation3], 1
    %s452 = scalar_lea.sflag [#allocation3], 1
    %453 = vsyncpa %s452, 1

</llo_original>
